<compile_context>
chip_gen: v6e
topology: v6e:2x2x1
jax: 0.10.0
libtpu: 0.0.40
codegen_flags: <defaults>
</compile_context>

<pallas_src>
import functools

import jax
import jax.numpy as jnp
from jax.experimental import pallas as pl
from jax.experimental.pallas import tpu as pltpu

C1 = 0.01 ** 2
C2 = 0.03 ** 2


def _ssim_kernel(x_ref, y_ref, o_ref, *, plane_w):
    # x_ref / y_ref / o_ref: (Pn, H, GW); GW = G * plane_w packed planes along
    # the lane axis.
    Pn, H, GW = x_ref.shape

    # Edge masks — hoisted: computed once per grid step, reused by all pools.
    col = jax.lax.broadcasted_iota(jnp.int32, (H, GW), 1)
    row = jax.lax.broadcasted_iota(jnp.int32, (H, GW), 0)
    jl = (col % plane_w) == 0                # left column of each packed plane
    jr = (col % plane_w) == plane_w - 1      # right column of each packed plane
    it = row == 0
    ib = row == H - 1

    def pool3x3(a):
        # Reflect-padded 3x3 mean (stride 1) on an unpadded (H, GW) slab.
        # Horizontal 3-tap: neighbours via lane rotation (XLU slot); reflect
        # boundary + packed-plane boundaries handled by the column masks.
        l = pltpu.roll(a, shift=1, axis=1)         # l[j] = a[j-1]
        r = pltpu.roll(a, shift=GW - 1, axis=1)    # r[j] = a[j+1]
        hs = a + jnp.where(jl, r, l) + jnp.where(jr, l, r)
        # Vertical 3-tap: sublane rotation + reflect row fixups.
        u = pltpu.roll(hs, shift=1, axis=0)        # u[i] = hs[i-1]
        d = pltpu.roll(hs, shift=H - 1, axis=0)    # d[i] = hs[i+1]
        vs = hs + jnp.where(it, d, u) + jnp.where(ib, u, d)
        return vs * (1.0 / 9.0)

    # Process one slab at a time to bound the live working set (review item:
    # strip-wise processing) while the grid step DMAs the whole Pn-slab block.
    @pl.loop(0, Pn)
    def _(p):
        x = x_ref[p]
        y = y_ref[p]

        mu_x = pool3x3(x)
        mu_y = pool3x3(y)
        sigma_x = pool3x3(x * x) - mu_x * mu_x
        sigma_y = pool3x3(y * y) - mu_y * mu_y
        sigma_xy = pool3x3(x * y) - mu_x * mu_y

        ssim_n = (2.0 * mu_x * mu_y + C1) * (2.0 * sigma_xy + C2)
        ssim_d = (mu_x * mu_x + mu_y * mu_y + C1) * (sigma_x + sigma_y + C2)

        inv_d = pl.reciprocal(ssim_d, approx=True)   # EUP slot (cheap)
        inv_d = inv_d * (2.0 - ssim_d * inv_d)       # one Newton refinement

        o_ref[p] = jnp.clip((1.0 - ssim_n * inv_d) * 0.5, 0.0, 1.0)


@jax.jit
def ssim(x, y):
    """x, y: (b, c, h, w) float32 -> (b, c, h, w) float32 SSIM loss map."""
    B, C, H, W = x.shape
    if H < 2 or W < 2:
        raise ValueError("SSIM with ReflectionPad2d(1) needs H, W >= 2.")
    N = B * C

    # --- lane packing factor -------------------------------------------------
    G = max(1, min(128 // W, N)) if W < 128 else 1
    GW = G * W
    Ns = -(-N // G)                          # number of packed slabs

    # --- per-slab (8,128)-tiled VMEM footprint (f32) --------------------------
    sub = -(-H // 8) * 8
    lanes = -(-GW // 128) * 128
    slab_bytes = sub * lanes * 4

    # --- generation-aware VMEM sizing -----------------------------------------
    try:
        vmem_cap = int(pltpu.get_tpu_info().vmem_capacity_bytes)
    except Exception:
        vmem_cap = 64 * 1024 * 1024          # conservative (v7x)
    vmem_limit = min(vmem_cap // 2, 48 * 1024 * 1024)
    block_budget = int(vmem_limit * 0.6)

    # Per grid step: 3 I/O arrays x 2 pipeline buffers x Pn slabs, plus ~20
    # slab-sized live temporaries inside the per-slab loop.
    pn_cap = max(1, (block_budget // slab_bytes - 20) // 6)
    if Ns >= 2:
        # Keep >= 2 grid steps so the "parallel" axis can split across v7x's
        # two TensorCores (harmless on single-TC v5e/v6e).
        pn_cap = min(pn_cap, -(-Ns // 2))
    Pn = max(1, min(pn_cap, Ns))

    # Prefer a block size dividing Ns (avoids a ragged-tail pad copy) as long
    # as it does not shrink the block by more than ~2x.
    for cand in range(Pn, 0, -1):
        if Ns % cand == 0:
            if cand >= max(1, Pn // 2):
                Pn = cand
            break

    num_blocks = -(-Ns // Pn)
    Ns_pad = num_blocks * Pn
    Np = Ns_pad * G                          # padded plane count

    x2 = x.reshape(N, H, W).astype(jnp.float32)
    y2 = y.reshape(N, H, W).astype(jnp.float32)
    if Np != N:
        # Small tail pad (< Pn*G planes); fused by XLA into the packing
        # transpose below. Zero planes are numerically safe: denominator >=
        # C1*C2 > 0 and loss == 0.
        pad = Np - N
        x2 = jnp.pad(x2, ((0, pad), (0, 0), (0, 0)))
        y2 = jnp.pad(y2, ((0, pad), (0, 0), (0, 0)))

    def pack(a):  # (Np, H, W) -> (Ns_pad, H, G*W), lane-dense
        return a.reshape(Ns_pad, G, H, W).transpose(0, 2, 1, 3).reshape(
            Ns_pad, H, GW)

    xp = pack(x2)
    yp = pack(y2)

    spec = pl.BlockSpec((Pn, H, GW), lambda i: (i, 0, 0))
    kernel = functools.partial(_ssim_kernel, plane_w=W)

    out = pl.pallas_call(
        kernel,
        out_shape=jax.ShapeDtypeStruct((Ns_pad, H, GW), jnp.float32),
        grid_spec=pltpu.PrefetchScalarGridSpec(
            num_scalar_prefetch=0,
            grid=(num_blocks,),
            in_specs=[spec, spec],
            out_specs=spec,
        ),
        compiler_params=pltpu.CompilerParams(
            dimension_semantics=("parallel",),
            vmem_limit_bytes=vmem_limit,
        ),
    )(xp, yp)

    # Unpack lanes -> planes and drop padding.
    out = out.reshape(Ns_pad, H, G, W).transpose(0, 2, 1, 3).reshape(Np, H, W)
    return out[:N].reshape(B, C, H, W)


def _ssim_ref(x, y):
    """Pure-JAX reference mirroring the PyTorch module."""
    def avg_pool3(a):  # a: (b, c, h+2, w+2) -> (b, c, h, w)
        Bq, Cq, Hp, Wp = a.shape
        H, W = Hp - 2, Wp - 2
        s = jnp.zeros((Bq, Cq, H, W), a.dtype)
        for di in range(3):
            for dj in range(3):
                s = s + a[:, :, di:di + H, dj:dj + W]
        return s / 9.0

    xp = jnp.pad(x, ((0, 0), (0, 0), (1, 1), (1, 1)), mode="reflect")
    yp = jnp.pad(y, ((0, 0), (0, 0), (1, 1), (1, 1)), mode="reflect")
    mu_x = avg_pool3(xp)
    mu_y = avg_pool3(yp)
    sigma_x = avg_pool3(xp ** 2) - mu_x ** 2
    sigma_y = avg_pool3(yp ** 2) - mu_y ** 2
    sigma_xy = avg_pool3(xp * yp) - mu_x * mu_y
    n = (2 * mu_x * mu_y + C1) * (2 * sigma_xy + C2)
    d = (mu_x ** 2 + mu_y ** 2 + C1) * (sigma_x + sigma_y + C2)
    return jnp.clip((1 - n / d) / 2, 0.0, 1.0)


if __name__ == "__main__":
    key = jax.random.PRNGKey(0)
    kx, ky = jax.random.split(key)
    B, C, H, W = 2, 4, 16, 16
    x = jax.random.uniform(kx, (B, C, H, W), dtype=jnp.float32)
    y = jax.random.uniform(ky, (B, C, H, W), dtype=jnp.float32)

    out = jax.block_until_ready(ssim(x, y))
    ref = jax.block_until_ready(_ssim_ref(x, y))

    assert out.shape == (B, C, H, W)
    assert jnp.allclose(out, ref, atol=1e-5, rtol=1e-5), "mismatch vs reference"
    print("KERNEL_OK")
</pallas_src>

<mosaic_0001>
module attributes {stable_mosaic.version = 11 : i64} {
  func.func @_ssim_kernel(%arg0: i32, %arg1: memref<1x16x128xf32, #tpu.memory_space<vmem>>, %arg2: memref<1x16x128xf32, #tpu.memory_space<vmem>>, %arg3: memref<1x16x128xf32, #tpu.memory_space<vmem>>) attributes {dimension_semantics = [#tpu.dimension_semantics<parallel>], iteration_bounds = array<i64: 1>, scalar_prefetch = 0 : i64, scratch_operands = 0 : i64, tpu.core_type = #tpu.core_type<tc>, window_params = [{transform_indices = @transform_0, window_bounds = array<i64: 1, 16, 128>}, {transform_indices = @transform_1, window_bounds = array<i64: 1, 16, 128>}, {transform_indices = @transform_2, window_bounds = array<i64: 1, 16, 128>}]} {
    %0 = tpu.iota {dimensions = array<i32: 1>} : vector<16x128xi32>
    %1 = tpu.iota {dimensions = array<i32: 0>} : vector<16x128xi32>
    %c16_i32 = arith.constant 16 : i32
    %c0_i32 = arith.constant 0 : i32
    %2 = arith.cmpi eq, %c16_i32, %c0_i32 : i32
    %c1_i32 = arith.constant 1 : i32
    %3 = arith.select %2, %c1_i32, %c16_i32 : i32
    %4 = vector.broadcast %3 : i32 to vector<16x128xi32>
    %5 = arith.remsi %0, %4 : vector<16x128xi32>
    %c0_i32_0 = arith.constant 0 : i32
    %6 = vector.broadcast %c0_i32_0 : i32 to vector<16x128xi32>
    %7 = arith.cmpi ne, %5, %6 : vector<16x128xi32>
    %c0_i32_1 = arith.constant 0 : i32
    %8 = vector.broadcast %c0_i32_1 : i32 to vector<16x128xi32>
    %9 = arith.cmpi slt, %5, %8 : vector<16x128xi32>
    %c0_i32_2 = arith.constant 0 : i32
    %10 = arith.cmpi slt, %3, %c0_i32_2 : i32
    %11 = vector.broadcast %10 : i1 to vector<16x128xi1>
    %12 = vector.broadcast %11 : vector<16x128xi1> to vector<16x128xi1>
    %13 = arith.xori %9, %12 : vector<16x128xi1>
    %14 = arith.andi %13, %7 : vector<16x128xi1>
    %15 = vector.broadcast %3 : i32 to vector<16x128xi32>
    %16 = arith.addi %5, %15 : vector<16x128xi32>
    %17 = arith.select %14, %16, %5 : vector<16x128xi1>, vector<16x128xi32>
    %c0_i32_3 = arith.constant 0 : i32
    %18 = vector.broadcast %c0_i32_3 : i32 to vector<16x128xi32>
    %19 = arith.cmpi eq, %17, %18 : vector<16x128xi32>
    %c16_i32_4 = arith.constant 16 : i32
    %c0_i32_5 = arith.constant 0 : i32
    %20 = arith.cmpi eq, %c16_i32_4, %c0_i32_5 : i32
    %c1_i32_6 = arith.constant 1 : i32
    %21 = arith.select %20, %c1_i32_6, %c16_i32_4 : i32
    %22 = vector.broadcast %21 : i32 to vector<16x128xi32>
    %23 = arith.remsi %0, %22 : vector<16x128xi32>
    %c0_i32_7 = arith.constant 0 : i32
    %24 = vector.broadcast %c0_i32_7 : i32 to vector<16x128xi32>
    %25 = arith.cmpi ne, %23, %24 : vector<16x128xi32>
    %c0_i32_8 = arith.constant 0 : i32
    %26 = vector.broadcast %c0_i32_8 : i32 to vector<16x128xi32>
    %27 = arith.cmpi slt, %23, %26 : vector<16x128xi32>
    %c0_i32_9 = arith.constant 0 : i32
    %28 = arith.cmpi slt, %21, %c0_i32_9 : i32
    %29 = vector.broadcast %28 : i1 to vector<16x128xi1>
    %30 = vector.broadcast %29 : vector<16x128xi1> to vector<16x128xi1>
    %31 = arith.xori %27, %30 : vector<16x128xi1>
    %32 = arith.andi %31, %25 : vector<16x128xi1>
    %33 = vector.broadcast %21 : i32 to vector<16x128xi32>
    %34 = arith.addi %23, %33 : vector<16x128xi32>
    %35 = arith.select %32, %34, %23 : vector<16x128xi1>, vector<16x128xi32>
    %c15_i32 = arith.constant 15 : i32
    %36 = vector.broadcast %c15_i32 : i32 to vector<16x128xi32>
    %37 = arith.cmpi eq, %35, %36 : vector<16x128xi32>
    %c0_i32_10 = arith.constant 0 : i32
    %38 = vector.broadcast %c0_i32_10 : i32 to vector<16x128xi32>
    %39 = arith.cmpi eq, %1, %38 : vector<16x128xi32>
    %c15_i32_11 = arith.constant 15 : i32
    %40 = vector.broadcast %c15_i32_11 : i32 to vector<16x128xi32>
    %41 = arith.cmpi eq, %1, %40 : vector<16x128xi32>
    %c0_i32_12 = arith.constant 0 : i32
    %c1_i32_13 = arith.constant 1 : i32
    %42 = arith.muli %c0_i32_12, %c1_i32_13 : i32
    %c0_i32_14 = arith.constant 0 : i32
    %43 = arith.addi %c0_i32_14, %42 : i32
    %44 = arith.index_cast %43 : i32 to index
    %c0 = arith.constant 0 : index
    %c0_15 = arith.constant 0 : index
    %45 = vector.load %arg1[%44, %c0, %c0_15] : memref<1x16x128xf32, #tpu.memory_space<vmem>>, vector<1x16x128xf32>
    %46 = vector.shape_cast %45 : vector<1x16x128xf32> to vector<16x128xf32>
    %47 = arith.index_cast %43 : i32 to index
    %c0_16 = arith.constant 0 : index
    %c0_17 = arith.constant 0 : index
    %48 = vector.load %arg2[%47, %c0_16, %c0_17] : memref<1x16x128xf32, #tpu.memory_space<vmem>>, vector<1x16x128xf32>
    %49 = vector.shape_cast %48 : vector<1x16x128xf32> to vector<16x128xf32>
    %c1_i32_18 = arith.constant 1 : i32
    %50 = tpu.dynamic_rotate %46 by %c1_i32_18 dim 1 : vector<16x128xf32>, i32 -> vector<16x128xf32>
    %c127_i32 = arith.constant 127 : i32
    %51 = tpu.dynamic_rotate %46 by %c127_i32 dim 1 : vector<16x128xf32>, i32 -> vector<16x128xf32>
    %52 = arith.select %19, %51, %50 : vector<16x128xi1>, vector<16x128xf32>
    %53 = arith.addf %46, %52 : vector<16x128xf32>
    %54 = arith.select %37, %50, %51 : vector<16x128xi1>, vector<16x128xf32>
    %55 = arith.addf %53, %54 : vector<16x128xf32>
    %c1_i32_19 = arith.constant 1 : i32
    %56 = tpu.dynamic_rotate %55 by %c1_i32_19 dim 0 : vector<16x128xf32>, i32 -> vector<16x128xf32>
    %c15_i32_20 = arith.constant 15 : i32
    %57 = tpu.dynamic_rotate %55 by %c15_i32_20 dim 0 : vector<16x128xf32>, i32 -> vector<16x128xf32>
    %58 = arith.select %39, %57, %56 : vector<16x128xi1>, vector<16x128xf32>
    %59 = arith.addf %55, %58 : vector<16x128xf32>
    %60 = arith.select %41, %56, %57 : vector<16x128xi1>, vector<16x128xf32>
    %61 = arith.addf %59, %60 : vector<16x128xf32>
    %cst = arith.constant 0.111111112 : f32
    %62 = vector.broadcast %cst : f32 to vector<16x128xf32>
    %63 = arith.mulf %61, %62 : vector<16x128xf32>
    %c1_i32_21 = arith.constant 1 : i32
    %64 = tpu.dynamic_rotate %49 by %c1_i32_21 dim 1 : vector<16x128xf32>, i32 -> vector<16x128xf32>
    %c127_i32_22 = arith.constant 127 : i32
    %65 = tpu.dynamic_rotate %49 by %c127_i32_22 dim 1 : vector<16x128xf32>, i32 -> vector<16x128xf32>
    %66 = arith.select %19, %65, %64 : vector<16x128xi1>, vector<16x128xf32>
    %67 = arith.addf %49, %66 : vector<16x128xf32>
    %68 = arith.select %37, %64, %65 : vector<16x128xi1>, vector<16x128xf32>
    %69 = arith.addf %67, %68 : vector<16x128xf32>
    %c1_i32_23 = arith.constant 1 : i32
    %70 = tpu.dynamic_rotate %69 by %c1_i32_23 dim 0 : vector<16x128xf32>, i32 -> vector<16x128xf32>
    %c15_i32_24 = arith.constant 15 : i32
    %71 = tpu.dynamic_rotate %69 by %c15_i32_24 dim 0 : vector<16x128xf32>, i32 -> vector<16x128xf32>
    %72 = arith.select %39, %71, %70 : vector<16x128xi1>, vector<16x128xf32>
    %73 = arith.addf %69, %72 : vector<16x128xf32>
    %74 = arith.select %41, %70, %71 : vector<16x128xi1>, vector<16x128xf32>
    %75 = arith.addf %73, %74 : vector<16x128xf32>
    %cst_25 = arith.constant 0.111111112 : f32
    %76 = vector.broadcast %cst_25 : f32 to vector<16x128xf32>
    %77 = arith.mulf %75, %76 : vector<16x128xf32>
    %78 = arith.mulf %46, %46 : vector<16x128xf32>
    %c1_i32_26 = arith.constant 1 : i32
    %79 = tpu.dynamic_rotate %78 by %c1_i32_26 dim 1 : vector<16x128xf32>, i32 -> vector<16x128xf32>
    %c127_i32_27 = arith.constant 127 : i32
    %80 = tpu.dynamic_rotate %78 by %c127_i32_27 dim 1 : vector<16x128xf32>, i32 -> vector<16x128xf32>
    %81 = arith.select %19, %80, %79 : vector<16x128xi1>, vector<16x128xf32>
    %82 = arith.addf %78, %81 : vector<16x128xf32>
    %83 = arith.select %37, %79, %80 : vector<16x128xi1>, vector<16x128xf32>
    %84 = arith.addf %82, %83 : vector<16x128xf32>
    %c1_i32_28 = arith.constant 1 : i32
    %85 = tpu.dynamic_rotate %84 by %c1_i32_28 dim 0 : vector<16x128xf32>, i32 -> vector<16x128xf32>
    %c15_i32_29 = arith.constant 15 : i32
    %86 = tpu.dynamic_rotate %84 by %c15_i32_29 dim 0 : vector<16x128xf32>, i32 -> vector<16x128xf32>
    %87 = arith.select %39, %86, %85 : vector<16x128xi1>, vector<16x128xf32>
    %88 = arith.addf %84, %87 : vector<16x128xf32>
    %89 = arith.select %41, %85, %86 : vector<16x128xi1>, vector<16x128xf32>
    %90 = arith.addf %88, %89 : vector<16x128xf32>
    %cst_30 = arith.constant 0.111111112 : f32
    %91 = vector.broadcast %cst_30 : f32 to vector<16x128xf32>
    %92 = arith.mulf %90, %91 : vector<16x128xf32>
    %93 = arith.mulf %63, %63 : vector<16x128xf32>
    %94 = arith.subf %92, %93 : vector<16x128xf32>
    %95 = arith.mulf %49, %49 : vector<16x128xf32>
    %c1_i32_31 = arith.constant 1 : i32
    %96 = tpu.dynamic_rotate %95 by %c1_i32_31 dim 1 : vector<16x128xf32>, i32 -> vector<16x128xf32>
    %c127_i32_32 = arith.constant 127 : i32
    %97 = tpu.dynamic_rotate %95 by %c127_i32_32 dim 1 : vector<16x128xf32>, i32 -> vector<16x128xf32>
    %98 = arith.select %19, %97, %96 : vector<16x128xi1>, vector<16x128xf32>
    %99 = arith.addf %95, %98 : vector<16x128xf32>
    %100 = arith.select %37, %96, %97 : vector<16x128xi1>, vector<16x128xf32>
    %101 = arith.addf %99, %100 : vector<16x128xf32>
    %c1_i32_33 = arith.constant 1 : i32
    %102 = tpu.dynamic_rotate %101 by %c1_i32_33 dim 0 : vector<16x128xf32>, i32 -> vector<16x128xf32>
    %c15_i32_34 = arith.constant 15 : i32
    %103 = tpu.dynamic_rotate %101 by %c15_i32_34 dim 0 : vector<16x128xf32>, i32 -> vector<16x128xf32>
    %104 = arith.select %39, %103, %102 : vector<16x128xi1>, vector<16x128xf32>
    %105 = arith.addf %101, %104 : vector<16x128xf32>
    %106 = arith.select %41, %102, %103 : vector<16x128xi1>, vector<16x128xf32>
    %107 = arith.addf %105, %106 : vector<16x128xf32>
    %cst_35 = arith.constant 0.111111112 : f32
    %108 = vector.broadcast %cst_35 : f32 to vector<16x128xf32>
    %109 = arith.mulf %107, %108 : vector<16x128xf32>
    %110 = arith.mulf %77, %77 : vector<16x128xf32>
    %111 = arith.subf %109, %110 : vector<16x128xf32>
    %112 = arith.mulf %46, %49 : vector<16x128xf32>
    %c1_i32_36 = arith.constant 1 : i32
    %113 = tpu.dynamic_rotate %112 by %c1_i32_36 dim 1 : vector<16x128xf32>, i32 -> vector<16x128xf32>
    %c127_i32_37 = arith.constant 127 : i32
    %114 = tpu.dynamic_rotate %112 by %c127_i32_37 dim 1 : vector<16x128xf32>, i32 -> vector<16x128xf32>
    %115 = arith.select %19, %114, %113 : vector<16x128xi1>, vector<16x128xf32>
    %116 = arith.addf %112, %115 : vector<16x128xf32>
    %117 = arith.select %37, %113, %114 : vector<16x128xi1>, vector<16x128xf32>
    %118 = arith.addf %116, %117 : vector<16x128xf32>
    %c1_i32_38 = arith.constant 1 : i32
    %119 = tpu.dynamic_rotate %118 by %c1_i32_38 dim 0 : vector<16x128xf32>, i32 -> vector<16x128xf32>
    %c15_i32_39 = arith.constant 15 : i32
    %120 = tpu.dynamic_rotate %118 by %c15_i32_39 dim 0 : vector<16x128xf32>, i32 -> vector<16x128xf32>
    %121 = arith.select %39, %120, %119 : vector<16x128xi1>, vector<16x128xf32>
    %122 = arith.addf %118, %121 : vector<16x128xf32>
    %123 = arith.select %41, %119, %120 : vector<16x128xi1>, vector<16x128xf32>
    %124 = arith.addf %122, %123 : vector<16x128xf32>
    %cst_40 = arith.constant 0.111111112 : f32
    %125 = vector.broadcast %cst_40 : f32 to vector<16x128xf32>
    %126 = arith.mulf %124, %125 : vector<16x128xf32>
    %127 = arith.mulf %63, %77 : vector<16x128xf32>
    %128 = arith.subf %126, %127 : vector<16x128xf32>
    %cst_41 = arith.constant 2.000000e+00 : f32
    %129 = vector.broadcast %cst_41 : f32 to vector<16x128xf32>
    %130 = arith.mulf %129, %63 : vector<16x128xf32>
    %131 = arith.mulf %130, %77 : vector<16x128xf32>
    %cst_42 = arith.constant 9.99999974E-5 : f32
    %132 = vector.broadcast %cst_42 : f32 to vector<16x128xf32>
    %133 = arith.addf %131, %132 : vector<16x128xf32>
    %cst_43 = arith.constant 2.000000e+00 : f32
    %134 = vector.broadcast %cst_43 : f32 to vector<16x128xf32>
    %135 = arith.mulf %134, %128 : vector<16x128xf32>
    %cst_44 = arith.constant 8.99999984E-4 : f32
    %136 = vector.broadcast %cst_44 : f32 to vector<16x128xf32>
    %137 = arith.addf %135, %136 : vector<16x128xf32>
    %138 = arith.mulf %133, %137 : vector<16x128xf32>
    %139 = arith.mulf %63, %63 : vector<16x128xf32>
    %140 = arith.mulf %77, %77 : vector<16x128xf32>
    %141 = arith.addf %139, %140 : vector<16x128xf32>
    %cst_45 = arith.constant 9.99999974E-5 : f32
    %142 = vector.broadcast %cst_45 : f32 to vector<16x128xf32>
    %143 = arith.addf %141, %142 : vector<16x128xf32>
    %144 = arith.addf %94, %111 : vector<16x128xf32>
    %cst_46 = arith.constant 8.99999984E-4 : f32
    %145 = vector.broadcast %cst_46 : f32 to vector<16x128xf32>
    %146 = arith.addf %144, %145 : vector<16x128xf32>
    %147 = arith.mulf %143, %146 : vector<16x128xf32>
    %148 = tpu.reciprocal %147 {approx = true} : vector<16x128xf32> -> vector<16x128xf32>
    %149 = arith.mulf %147, %148 : vector<16x128xf32>
    %cst_47 = arith.constant 2.000000e+00 : f32
    %150 = vector.broadcast %cst_47 : f32 to vector<16x128xf32>
    %151 = arith.subf %150, %149 : vector<16x128xf32>
    %152 = arith.mulf %148, %151 : vector<16x128xf32>
    %153 = arith.mulf %138, %152 : vector<16x128xf32>
    %cst_48 = arith.constant 1.000000e+00 : f32
    %154 = vector.broadcast %cst_48 : f32 to vector<16x128xf32>
    %155 = arith.subf %154, %153 : vector<16x128xf32>
    %cst_49 = arith.constant 5.000000e-01 : f32
    %156 = vector.broadcast %cst_49 : f32 to vector<16x128xf32>
    %157 = arith.mulf %155, %156 : vector<16x128xf32>
    %cst_50 = arith.constant 0.000000e+00 : f32
    %cst_51 = arith.constant 1.000000e+00 : f32
    %158 = vector.broadcast %cst_50 : f32 to vector<16x128xf32>
    %159 = arith.maximumf %158, %157 : vector<16x128xf32>
    %160 = vector.broadcast %cst_51 : f32 to vector<16x128xf32>
    %161 = arith.minimumf %160, %159 : vector<16x128xf32>
    %162 = arith.index_cast %43 : i32 to index
    %c0_52 = arith.constant 0 : index
    %c0_53 = arith.constant 0 : index
    %163 = vector.load %arg3[%162, %c0_52, %c0_53] : memref<1x16x128xf32, #tpu.memory_space<vmem>>, vector<1x16x128xf32>
    %164 = vector.shape_cast %163 : vector<1x16x128xf32> to vector<16x128xf32>
    %165 = vector.shape_cast %161 : vector<16x128xf32> to vector<1x16x128xf32>
    tpu.vector_store %arg3[%162, %c0_52, %c0_53], %165 {strides = array<i32>} : memref<1x16x128xf32, #tpu.memory_space<vmem>>, vector<1x16x128xf32>,
    %c1_i32_54 = arith.constant 1 : i32
    return
  }
  func.func @transform_0(%arg0: i32) -> (i32, i32, i32) {
    %c0_i32 = arith.constant 0 : i32
    %c0_i32_0 = arith.constant 0 : i32
    %c0_i32_1 = arith.constant 0 : i32
    return %arg0, %c0_i32, %c0_i32_0 : i32, i32, i32
  }
  func.func @transform_1(%arg0: i32) -> (i32, i32, i32) {
    %c0_i32 = arith.constant 0 : i32
    %c0_i32_0 = arith.constant 0 : i32
    %c0_i32_1 = arith.constant 0 : i32
    return %arg0, %c0_i32, %c0_i32_0 : i32, i32, i32
  }
  func.func @transform_2(%arg0: i32) -> (i32, i32, i32) {
    %c0_i32 = arith.constant 0 : i32
    %c0_i32_0 = arith.constant 0 : i32
    %c0_i32_1 = arith.constant 0 : i32
    return %arg0, %c0_i32, %c0_i32_0 : i32, i32, i32
  }
}

</mosaic_0001>

<llo_original>
// kernel: ssim.1
$region0: #{ssim.1}
  #allocation0 [shape = 'u32[]', space=smem, size = 0x4, offset = 0x4, fixed_abs, tag = 'smem constant byte address 0x4 - core index']
  #allocation1 [shape = 'u32[144,128]{1,0:T(1,128)}', space=vmem, size = 0x12000, scoped, tag = 'internal scratch']
  %s0 = inlined_call_operand.vmem [shape: f32[1,16,128], index: 0, kind: input, shape index: {}]
  %s1 = inlined_call_operand.vmem [shape: f32[1,16,128], index: 1, kind: input, shape index: {}]
  %s2 = inlined_call_operand.vmem [shape: f32[1,16,128], index: 2, kind: output, shape index: {}]
  %s3 = sld [smem:[#allocation0]]
  $region18: #{ssim.1} parent=0
    _
  %s5 = ssub.s32 1, %s3
  %s6 = scalar_select 0, %s5, %s3
  // Predicated region
  $region2: #{ssim.1} parent=0 // pred_check
    _
  $region3: #{ssim.1} parent=0 // pred_check_branch
    %8 = sbr.rel (0) target = $region5
  $region4: #{ssim.1} parent=0 // pred_region
    _
  $region5: #{ssim.1} parent=0 // pred_fallthru
    _
  // Predicated region
  $region6: #{ssim.1} parent=0 // pred_check
    _
  $region7: #{ssim.1} parent=0 // pred_check_branch
    %10 = sbr.rel (0) target = $region9
  $region8: #{ssim.1} parent=0 // pred_region
    _
  $region9: #{ssim.1} parent=0 // pred_fallthru
    _
  %v11 = vlaneseq
  %v12 = vand.u32 %v11, 127
  %v13 = vlaneseq
  %v14 = vshrl.u32 %v13, 7
  %v15 = vadd.s32 %v14, 8
  %vm16 = vcmp.lt.s32.totalorder %v12, 0
  %v17 = vsub.s32 0, %v12
  %v18 = vsel %vm16, %v17, %v12
  %v19 = vshrl.u32 %v18, 4
  %v20 = vand.u32 %v18, 15
  %v21 = vsub.s32 0, %v20
  %v22 = vsel %vm16, %v21, %v20
  %vm23 = vcmp.ne.s32.totalorder %v22, 0
  %vm24 = vcmp.lt.s32.totalorder %v22, 0
  %vm25 = vmand %vm24, %vm23
  %v26 = vadd.s32 %v22, 16
  %v27 = vsel %vm25, %v26, %v22
  %vm28 = vcmp.eq.s32.totalorder %v27, 0
  %vm29 = vcmp.eq.s32.totalorder %v27, 15
  %vm30 = vcmp.eq.s32.totalorder %v14, 0
  %vm31 = vcmp.eq.s32.totalorder %v15, 0
  %vm32 = vcmp.eq.s32.totalorder %v14, 15
  %vm33 = vcmp.eq.s32.totalorder %v15, 15
  %v34 = vld [vmem:[%s0] sm:$0xff]
  %v35 = vld [vmem:[%s0 + $0x8] sm:$0xff]
  %v36 = vld [vmem:[%s1] sm:$0xff]
  %v37 = vld [vmem:[%s1 + $0x8] sm:$0xff]
  %38 = vrot.lane.b32.xlu0 %v34, 1
  %v39 = vpop.permute.xlu0 %38
  %40 = vrot.lane.b32.xlu0 %v35, 1
  %v41 = vpop.permute.xlu0 %40
  %42 = vrot.lane.b32.xlu0 %v34, 127
  %v43 = vpop.permute.xlu0 %42
  %44 = vrot.lane.b32.xlu0 %v35, 127
  %v45 = vpop.permute.xlu0 %44
  %v46 = vsel %vm28, %v43, %v39
  %v47 = vsel %vm28, %v45, %v41
  %v48 = vadd.f32 %v34, %v46
  %v49 = vadd.f32 %v35, %v47
  %v50 = vsel %vm29, %v39, %v43
  %v51 = vsel %vm29, %v41, %v45
  %v52 = vadd.f32 %v48, %v50
  %v53 = vadd.f32 %v49, %v51
  %v54 = vrot.slane %v52, 7
  %v55 = vrot.slane %v53, 7
  %vm56 = vcmp.lt.s32.totalorder %v14, 1
  %v57 = vsel %vm56, %v54, %v55
  %v58 = vsel %vm56, %v55, %v54
  %v59 = vrot.slane %v52, 1
  %v60 = vrot.slane %v53, 1
  %vm61 = vcmp.lt.s32.totalorder %v14, 7
  %v62 = vsel %vm61, %v59, %v60
  %v63 = vsel %vm61, %v60, %v59
  %v64 = vsel %vm30, %v62, %v58
  %v65 = vsel %vm31, %v63, %v57
  %v66 = vadd.f32 %v52, %v64
  %v67 = vadd.f32 %v53, %v65
  %v68 = vsel %vm32, %v58, %v62
  %v69 = vsel %vm33, %v57, %v63
  %v70 = vadd.f32 %v66, %v68
  %v71 = vadd.f32 %v67, %v69
  %v72 = vmul.f32 %v70, 0.11111111
  %v73 = vmul.f32 %v71, 0.11111111
  %74 = vrot.lane.b32.xlu0 %v36, 1
  %v75 = vpop.permute.xlu0 %74
  %76 = vrot.lane.b32.xlu0 %v37, 1
  %v77 = vpop.permute.xlu0 %76
  %78 = vrot.lane.b32.xlu0 %v36, 127
  %v79 = vpop.permute.xlu0 %78
  %80 = vrot.lane.b32.xlu0 %v37, 127
  %v81 = vpop.permute.xlu0 %80
  %v82 = vsel %vm28, %v79, %v75
  %v83 = vsel %vm28, %v81, %v77
  %v84 = vadd.f32 %v36, %v82
  %v85 = vadd.f32 %v37, %v83
  %v86 = vsel %vm29, %v75, %v79
  %v87 = vsel %vm29, %v77, %v81
  %v88 = vadd.f32 %v84, %v86
  %v89 = vadd.f32 %v85, %v87
  %v90 = vrot.slane %v88, 7
  %v91 = vrot.slane %v89, 7
  %v92 = vsel %vm56, %v90, %v91
  %v93 = vsel %vm56, %v91, %v90
  %v94 = vrot.slane %v88, 1
  %v95 = vrot.slane %v89, 1
  %v96 = vsel %vm61, %v94, %v95
  %v97 = vsel %vm61, %v95, %v94
  %v98 = vsel %vm30, %v96, %v93
  %v99 = vsel %vm31, %v97, %v92
  %v100 = vadd.f32 %v88, %v98
  %v101 = vadd.f32 %v89, %v99
  %v102 = vsel %vm32, %v93, %v96
  %v103 = vsel %vm33, %v92, %v97
  %v104 = vadd.f32 %v100, %v102
  %v105 = vadd.f32 %v101, %v103
  %v106 = vmul.f32 %v104, 0.11111111
  %v107 = vmul.f32 %v105, 0.11111111
  %v108 = vmul.f32 %v34, %v34
  %v109 = vmul.f32 %v35, %v35
  %110 = vrot.lane.b32.xlu0 %v108, 1
  %v111 = vpop.permute.xlu0 %110
  %112 = vrot.lane.b32.xlu0 %v109, 1
  %v113 = vpop.permute.xlu0 %112
  %114 = vrot.lane.b32.xlu0 %v108, 127
  %v115 = vpop.permute.xlu0 %114
  %116 = vrot.lane.b32.xlu0 %v109, 127
  %v117 = vpop.permute.xlu0 %116
  %v118 = vsel %vm28, %v115, %v111
  %v119 = vsel %vm28, %v117, %v113
  %v120 = vadd.f32 %v108, %v118
  %v121 = vadd.f32 %v109, %v119
  %v122 = vsel %vm29, %v111, %v115
  %v123 = vsel %vm29, %v113, %v117
  %v124 = vadd.f32 %v120, %v122
  %v125 = vadd.f32 %v121, %v123
  %v126 = vrot.slane %v124, 7
  %v127 = vrot.slane %v125, 7
  %v128 = vsel %vm56, %v126, %v127
  %v129 = vsel %vm56, %v127, %v126
  %v130 = vrot.slane %v124, 1
  %v131 = vrot.slane %v125, 1
  %v132 = vsel %vm61, %v130, %v131
  %v133 = vsel %vm61, %v131, %v130
  %v134 = vsel %vm30, %v132, %v129
  %v135 = vsel %vm31, %v133, %v128
  %v136 = vadd.f32 %v124, %v134
  %v137 = vadd.f32 %v125, %v135
  %v138 = vsel %vm32, %v129, %v132
  %v139 = vsel %vm33, %v128, %v133
  %v140 = vadd.f32 %v136, %v138
  %v141 = vadd.f32 %v137, %v139
  %v142 = vmul.f32 %v140, 0.11111111
  %v143 = vmul.f32 %v141, 0.11111111
  %v144 = vmul.f32 %v72, %v72
  %v145 = vmul.f32 %v73, %v73
  %v146 = vsub.f32 %v142, %v144
  %v147 = vsub.f32 %v143, %v145
  %v148 = vmul.f32 %v36, %v36
  %v149 = vmul.f32 %v37, %v37
  %150 = vrot.lane.b32.xlu0 %v148, 1
  %v151 = vpop.permute.xlu0 %150
  %152 = vrot.lane.b32.xlu0 %v149, 1
  %v153 = vpop.permute.xlu0 %152
  %154 = vrot.lane.b32.xlu0 %v148, 127
  %v155 = vpop.permute.xlu0 %154
  %156 = vrot.lane.b32.xlu0 %v149, 127
  %v157 = vpop.permute.xlu0 %156
  %v158 = vsel %vm28, %v155, %v151
  %v159 = vsel %vm28, %v157, %v153
  %v160 = vadd.f32 %v148, %v158
  %v161 = vadd.f32 %v149, %v159
  %v162 = vsel %vm29, %v151, %v155
  %v163 = vsel %vm29, %v153, %v157
  %v164 = vadd.f32 %v160, %v162
  %v165 = vadd.f32 %v161, %v163
  %v166 = vrot.slane %v164, 7
  %v167 = vrot.slane %v165, 7
  %v168 = vsel %vm56, %v166, %v167
  %v169 = vsel %vm56, %v167, %v166
  %v170 = vrot.slane %v164, 1
  %v171 = vrot.slane %v165, 1
  %v172 = vsel %vm61, %v170, %v171
  %v173 = vsel %vm61, %v171, %v170
  %v174 = vsel %vm30, %v172, %v169
  %v175 = vsel %vm31, %v173, %v168
  %v176 = vadd.f32 %v164, %v174
  %v177 = vadd.f32 %v165, %v175
  %v178 = vsel %vm32, %v169, %v172
  %v179 = vsel %vm33, %v168, %v173
  %v180 = vadd.f32 %v176, %v178
  %v181 = vadd.f32 %v177, %v179
  %v182 = vmul.f32 %v180, 0.11111111
  %v183 = vmul.f32 %v181, 0.11111111
  %v184 = vmul.f32 %v106, %v106
  %v185 = vmul.f32 %v107, %v107
  %v186 = vsub.f32 %v182, %v184
  %v187 = vsub.f32 %v183, %v185
  %v188 = vmul.f32 %v34, %v36
  %v189 = vmul.f32 %v35, %v37
  %190 = vrot.lane.b32.xlu0 %v188, 1
  %v191 = vpop.permute.xlu0 %190
  %192 = vrot.lane.b32.xlu0 %v189, 1
  %v193 = vpop.permute.xlu0 %192
  %194 = vrot.lane.b32.xlu0 %v188, 127
  %v195 = vpop.permute.xlu0 %194
  %196 = vrot.lane.b32.xlu0 %v189, 127
  %v197 = vpop.permute.xlu0 %196
  %v198 = vsel %vm28, %v195, %v191
  %v199 = vsel %vm28, %v197, %v193
  %v200 = vadd.f32 %v188, %v198
  %v201 = vadd.f32 %v189, %v199
  %v202 = vsel %vm29, %v191, %v195
  %v203 = vsel %vm29, %v193, %v197
  %v204 = vadd.f32 %v200, %v202
  %v205 = vadd.f32 %v201, %v203
  %v206 = vrot.slane %v204, 7
  %v207 = vrot.slane %v205, 7
  %v208 = vsel %vm56, %v206, %v207
  %v209 = vsel %vm56, %v207, %v206
  %v210 = vrot.slane %v204, 1
  %v211 = vrot.slane %v205, 1
  %v212 = vsel %vm61, %v210, %v211
  %v213 = vsel %vm61, %v211, %v210
  %v214 = vsel %vm30, %v212, %v209
  %v215 = vsel %vm31, %v213, %v208
  %v216 = vadd.f32 %v204, %v214
  %v217 = vadd.f32 %v205, %v215
  %v218 = vsel %vm32, %v209, %v212
  %v219 = vsel %vm33, %v208, %v213
  %v220 = vadd.f32 %v216, %v218
  %v221 = vadd.f32 %v217, %v219
  %v222 = vmul.f32 %v220, 0.11111111
  %v223 = vmul.f32 %v221, 0.11111111
  %v224 = vmul.f32 %v72, %v106
  %v225 = vmul.f32 %v73, %v107
  %v226 = vsub.f32 %v222, %v224
  %v227 = vsub.f32 %v223, %v225
  %v228 = vmul.f32 %v72, 2.0
  %v229 = vmul.f32 %v73, 2.0
  %v230 = vmul.f32 %v228, %v106
  %v231 = vmul.f32 %v229, %v107
  %v232 = vadd.f32 %v230, 0.0001
  %v233 = vadd.f32 %v231, 0.0001
  %v234 = vmul.f32 %v226, 2.0
  %v235 = vmul.f32 %v227, 2.0
  %v236 = vadd.f32 %v234, 0.0009
  %v237 = vadd.f32 %v235, 0.0009
  %v238 = vmul.f32 %v232, %v236
  %v239 = vmul.f32 %v233, %v237
  %v240 = vadd.f32 %v144, %v184
  %v241 = vadd.f32 %v145, %v185
  %v242 = vadd.f32 %v240, 0.0001
  %v243 = vadd.f32 %v241, 0.0001
  %v244 = vadd.f32 %v146, %v186
  %v245 = vadd.f32 %v147, %v187
  %v246 = vadd.f32 %v244, 0.0009
  %v247 = vadd.f32 %v245, 0.0009
  %v248 = vmul.f32 %v242, %v246
  %v249 = vmul.f32 %v243, %v247
  %v250 = vrcp.pop %v248
  %v251 = vrcp.pop %v249
  %v252 = vmul.f32 %v248, %v250
  %v253 = vmul.f32 %v249, %v251
  %v254 = vsub.f32 2.0, %v252
  %v255 = vsub.f32 2.0, %v253
  %v256 = vmul.f32 %v250, %v254
  %v257 = vmul.f32 %v251, %v255
  %v258 = vmul.f32 %v238, %v256
  %v259 = vmul.f32 %v239, %v257
  %v260 = vsub.f32 1.0, %v258
  %v261 = vsub.f32 1.0, %v259
  %v262 = vmul.f32 %v260, 0.5
  %v263 = vmul.f32 %v261, 0.5
  %v264 = vmax.f32 %v262, 0.0
  %v265 = vmax.f32 %v263, 0.0
  %v266 = vmin.f32 %v264, 1.0
  %v267 = vmin.f32 %v265, 1.0
  %268 = vst [vmem:[%s2] sm:$0xff] %v266
  %269 = vst [vmem:[%s2 + $0x8] sm:$0xff] %v267
  // Predicated region
  $region10: #{ssim.1} parent=0 // pred_check
    _
  $region11: #{ssim.1} parent=0 // pred_check_branch
    %271 = sbr.rel (0) target = $region13
  $region12: #{ssim.1} parent=0 // pred_region
    _
  $region13: #{ssim.1} parent=0 // pred_fallthru
    _
  // Predicated region
  $region14: #{ssim.1} parent=0 // pred_check
    _
  $region15: #{ssim.1} parent=0 // pred_check_branch
    %273 = sbr.rel (0) target = $region17
  $region16: #{ssim.1} parent=0 // pred_region
    _
  $region17: #{ssim.1} parent=0 // pred_fallthru
    _

</llo_original>
